<compile_context>
chip_gen: v5e
topology: v5e:2x2
jax: 0.10.0
libtpu: 0.0.40
codegen_flags: <defaults>
</compile_context>

<pallas_src>
import functools
import math

import jax
import jax.numpy as jnp
from jax.experimental import pallas as pl
from jax.experimental.pallas import tpu as pltpu


def _round_up(x: int, m: int) -> int:
    return ((x + m - 1) // m) * m


# ----------------------------------------------------------------------------
# Kernels: purely bandwidth-bound elementwise adds (VPU), no reductions.
# ----------------------------------------------------------------------------
def _pe_add_kernel_3d(x_ref, pe_ref, o_ref):
    # x_ref: (TS, B, D), pe_ref: (TS, 1, D) -> sublane broadcast over batch.
    o_ref[...] = (x_ref[...] + pe_ref[...]).astype(o_ref.dtype)


def _pe_add_kernel_folded(x_ref, pe_ref, o_ref, *, batch):
    # x_ref: (TS, B*D) lane-dense, pe_ref: (TS, D); broadcast pe over batch by
    # tiling along the lane axis (XLU concat; free slot for a mem-bound add).
    pe = pe_ref[...]
    if batch > 1:
        pe = jnp.tile(pe, (1, batch))
    o_ref[...] = (x_ref[...] + pe).astype(o_ref.dtype)


# ----------------------------------------------------------------------------
# Sinusoidal table identical to the PyTorch __init__ (handles odd d_model too).
# ----------------------------------------------------------------------------
def make_pe_buffer(d_model: int, max_len: int = 5000,
                   dtype=jnp.float32) -> jnp.ndarray:
    position = jnp.arange(0, max_len, dtype=jnp.float32)[:, None]          # (L, 1)
    div_term = jnp.exp(
        jnp.arange(0, d_model, 2, dtype=jnp.float32) * (-math.log(10000.0) / d_model)
    )                                                                       # (ceil(D/2),)
    pe = jnp.zeros((max_len, d_model), dtype=jnp.float32)
    pe = pe.at[:, 0::2].set(jnp.sin(position * div_term))
    pe = pe.at[:, 1::2].set(jnp.cos(position * div_term)[:, : d_model // 2])
    # torch: pe.unsqueeze(0).transpose(0, 1) -> (max_len, 1, d_model)
    return pe[:, None, :].astype(dtype)


# ----------------------------------------------------------------------------
# Generation-aware VMEM sizing.
# ----------------------------------------------------------------------------
def _vmem_budget_and_limit():
    phys = None
    try:
        info = pltpu.get_tpu_info()
        phys = getattr(info, "vmem_capacity_bytes", None)
    except Exception:
        phys = None
    if phys is None:
        phys = 64 * 1024 * 1024                    # assume smallest part (v7x)
    if phys >= 96 * 1024 * 1024:                   # v5e / v6e: 128 MiB physical
        return 48 * 1024 * 1024, 64 * 1024 * 1024  # (tile budget, vmem limit)
    return 24 * 1024 * 1024, 32 * 1024 * 1024      # v7x: 64 MiB physical


def _choose_seq_tile(S: int, per_row_bytes: int, vmem_budget_bytes: int) -> int:
    """Largest seq-tile (multiple of 8, capped at 512) whose double-buffered
    padded working set fits the budget; prefers >=2 and an even number of grid
    steps so the parallel seq axis balances across 2 TensorCores (v7x)."""
    ts = vmem_budget_bytes // (2 * per_row_bytes)      # 2x for double buffering
    ts = max(8, (ts // 8) * 8)
    ts = min(ts, 512)                                  # roofline plateau ~512
    if S > 8:
        ts = min(ts, max(8, _round_up(pl.cdiv(S, 2), 8)))   # >=2 steps
    ts = min(ts, _round_up(S, 8))                      # never bigger than needed
    steps = pl.cdiv(S, ts)
    while 1 < steps <= 16 and steps % 2 == 1 and ts > 8:    # even step count
        ts -= 8
        steps = pl.cdiv(S, ts)
    return ts


# ----------------------------------------------------------------------------
# Wrapper.
# ----------------------------------------------------------------------------
def positional_encoding(x: jnp.ndarray, pe: jnp.ndarray, *,
                        donate_x: bool = False) -> jnp.ndarray:
    """x: [S, B, D], pe: [max_len, 1, D] -> [S, B, D] (eval-mode forward)."""
    S, B, D = x.shape
    max_len = pe.shape[0]
    assert S <= max_len, f"seq_len {S} exceeds positional table ({max_len})"

    if pe.dtype != x.dtype:
        pe = pe.astype(x.dtype)          # keep both operands in the model dtype

    itemsize = jnp.dtype(x.dtype).itemsize
    sublane = 16 if itemsize == 2 else (32 if itemsize == 1 else 8)
    budget, vmem_limit = _vmem_budget_and_limit()

    cost = pl.CostEstimate(
        flops=S * B * D,
        transcendentals=0,
        bytes_accessed=(2 * S * B * D + S * D) * itemsize,
    )
    cparams = pltpu.CompilerParams(
        dimension_semantics=("parallel",),
        vmem_limit_bytes=vmem_limit,
    )
    io_alias = {0: 0} if donate_x else {}

    # Fold batch into the lane axis when the 3-D (ts, B, D) tiling would waste
    # vreg sublanes (B < 8) or force masked partial stores (D not 128-aligned),
    # as long as the in-kernel lane-tile of pe stays cheap (small B).
    fold = (B < 8 or D % 128 != 0) and B <= 16

    if fold:
        pd = _round_up(D, 128)
        pbd = _round_up(B * D, 128)
        per_row = (2 * pbd + pd) * itemsize            # x-in + x-out + pe
        ts = _choose_seq_tile(S, per_row, budget)

        x2 = x.reshape(S, B * D)                       # free row-major reshape
        pe2 = pe.reshape(max_len, D)
        kernel = functools.partial(_pe_add_kernel_folded, batch=B)
        out = pl.pallas_call(
            kernel,
            out_shape=jax.ShapeDtypeStruct((S, B * D), x.dtype),
            grid_spec=pltpu.PrefetchScalarGridSpec(
                num_scalar_prefetch=0,
                grid=(pl.cdiv(S, ts),),
                in_specs=[
                    pl.BlockSpec((ts, B * D), lambda i: (i, 0)),
                    # Full pe table passed; the index_map windows the rows, so
                    # no wrapper-side pe[:S] slice is materialized in HBM.
                    pl.BlockSpec((ts, D), lambda i: (i, 0)),
                ],
                out_specs=pl.BlockSpec((ts, B * D), lambda i: (i, 0)),
            ),
            compiler_params=cparams,
            cost_estimate=cost,
            input_output_aliases=io_alias,
        )(x2, pe2)
        return out.reshape(S, B, D)

    # Dense 3-D streaming path (B >= 8 and D a multiple of 128).
    pb = _round_up(B, sublane)
    pd = _round_up(D, 128)
    per_row = (2 * pb * pd + sublane * pd) * itemsize  # x-in + x-out + pe, padded
    ts = _choose_seq_tile(S, per_row, budget)

    return pl.pallas_call(
        _pe_add_kernel_3d,
        out_shape=jax.ShapeDtypeStruct((S, B, D), x.dtype),
        grid_spec=pltpu.PrefetchScalarGridSpec(
            num_scalar_prefetch=0,
            grid=(pl.cdiv(S, ts),),
            in_specs=[
                pl.BlockSpec((ts, B, D), lambda i: (i, 0, 0)),
                pl.BlockSpec((ts, 1, D), lambda i: (i, 0, 0)),
            ],
            out_specs=pl.BlockSpec((ts, B, D), lambda i: (i, 0, 0)),
        ),
        compiler_params=cparams,
        cost_estimate=cost,
        input_output_aliases=io_alias,
    )(x, pe)


if __name__ == "__main__":
    key = jax.random.PRNGKey(0)
    max_len = 5000

    # --- Check 1: small batch / small d_model -> lane-folded [S, B*D] path ---
    S1, B1, D1 = 8, 2, 32
    pe1 = make_pe_buffer(D1, max_len, dtype=jnp.float32)
    x1 = jax.random.normal(key, (S1, B1, D1), dtype=jnp.float32)
    o1 = jax.block_until_ready(positional_encoding(x1, pe1))
    assert o1.shape == (S1, B1, D1)
    assert jnp.allclose(o1, x1 + pe1[:S1], atol=1e-6, rtol=1e-6)

    # --- Check 2: non-divisible seq length (partial tail tile, 2-step grid) --
    S2 = 20
    x2 = jax.random.normal(jax.random.PRNGKey(1), (S2, B1, D1), dtype=jnp.float32)
    o2 = jax.block_until_ready(positional_encoding(x2, pe1))
    assert jnp.allclose(o2, x2 + pe1[:S2], atol=1e-6, rtol=1e-6)

    # --- Check 3: batch>=8, 128-aligned d_model -> dense 3-D streaming path --
    S3, B3, D3 = 16, 8, 256
    pe3 = make_pe_buffer(D3, max_len, dtype=jnp.float32)
    x3 = jax.random.normal(jax.random.PRNGKey(2), (S3, B3, D3), dtype=jnp.float32)
    o3 = jax.block_until_ready(positional_encoding(x3, pe3))
    assert jnp.allclose(o3, x3 + pe3[:S3], atol=1e-6, rtol=1e-6)

    print("KERNEL_OK")
</pallas_src>

<mosaic_0001>
module attributes {stable_mosaic.version = 11 : i64} {
  func.func @_pe_add_kernel_folded(%arg0: i32, %arg1: memref<8x64xf32, #tpu.memory_space<vmem>>, %arg2: memref<8x32xf32, #tpu.memory_space<vmem>>, %arg3: memref<8x64xf32, #tpu.memory_space<vmem>>) attributes {dimension_semantics = [#tpu.dimension_semantics<parallel>], iteration_bounds = array<i64: 1>, scalar_prefetch = 0 : i64, scratch_operands = 0 : i64, tpu.core_type = #tpu.core_type<tc>, window_params = [{transform_indices = @transform_0, window_bounds = array<i64: 8, 64>}, {transform_indices = @transform_1, window_bounds = array<i64: 8, 32>}, {transform_indices = @transform_2, window_bounds = array<i64: 8, 64>}]} {
    %c0 = arith.constant 0 : index
    %c0_0 = arith.constant 0 : index
    %0 = vector.load %arg2[%c0, %c0_0] : memref<8x32xf32, #tpu.memory_space<vmem>>, vector<8x32xf32>
    %1 = tpu.concatenate %0, %0 in 1 : vector<8x32xf32>, vector<8x32xf32> -> vector<8x64xf32>
    %c0_1 = arith.constant 0 : index
    %c0_2 = arith.constant 0 : index
    %2 = vector.load %arg1[%c0_1, %c0_2] : memref<8x64xf32, #tpu.memory_space<vmem>>, vector<8x64xf32>
    %3 = arith.addf %2, %1 : vector<8x64xf32>
    %c0_3 = arith.constant 0 : index
    %c0_4 = arith.constant 0 : index
    %4 = vector.load %arg3[%c0_3, %c0_4] : memref<8x64xf32, #tpu.memory_space<vmem>>, vector<8x64xf32>
    tpu.vector_store %arg3[%c0_3, %c0_4], %3 {strides = array<i32>} : memref<8x64xf32, #tpu.memory_space<vmem>>, vector<8x64xf32>,
    return
  }
  func.func @transform_0(%arg0: i32) -> (i32, i32) {
    %c0_i32 = arith.constant 0 : i32
    %c0_i32_0 = arith.constant 0 : i32
    return %arg0, %c0_i32 : i32, i32
  }
  func.func @transform_1(%arg0: i32) -> (i32, i32) {
    %c0_i32 = arith.constant 0 : i32
    %c0_i32_0 = arith.constant 0 : i32
    return %arg0, %c0_i32 : i32, i32
  }
  func.func @transform_2(%arg0: i32) -> (i32, i32) {
    %c0_i32 = arith.constant 0 : i32
    %c0_i32_0 = arith.constant 0 : i32
    return %arg0, %c0_i32 : i32, i32
  }
}

</mosaic_0001>

<llo_original>
// kernel: tpu_custom_call.1
$region0: #{tpu_custom_call.1}
  #allocation0 [shape = 'u32[]', space=smem, size = 0x4, offset = 0x4, fixed_abs, tag = 'smem constant byte address 0x4 - core index']
  #allocation1 [shape = 'u32[72,128]{1,0:T(1,128)}', space=vmem, size = 0x9000, scoped, tag = 'internal scratch']
  %s0 = inlined_call_operand.vmem [shape: f32[8,64], index: 0, kind: input, shape index: {}]
  %s1 = inlined_call_operand.vmem [shape: f32[5000,32], index: 1, kind: input, shape index: {}]
  %s2 = inlined_call_operand.hbm [shape: f32[8,64], index: 2, kind: output, shape index: {}]
  %s3 = sld [smem:[#allocation0]]
  $region18: #{tpu_custom_call.1} parent=0
    _
  %s5 = ssub.s32 1, %s3
  %s6 = scalar_select 0, %s5, %s3
  $region1: #{tpu_custom_call.1} parent=0
    #allocation2 [shape = 'u8[4096]{0}', space=vmem, size = 0x1000, scoped, tag = 'output window, operand 0, single buffered']
    #allocation3 [shape = 's32[1]{0}', space=sflag, size = 0x4, scoped, tag = 'scoped memory for tpu_custom_call.1']
    %7 = vsyncpa [#allocation3], 0
    // Predicated region
    $region2: #{tpu_custom_call.1} parent=1 // pred_check
      _
    $region3: #{tpu_custom_call.1} parent=1 // pred_check_branch
      %9 = sbr.rel (0) target = $region5
    $region4: #{tpu_custom_call.1} parent=1 // pred_region
      _
    $region5: #{tpu_custom_call.1} parent=1 // pred_fallthru
      _
    // Predicated region
    $region6: #{tpu_custom_call.1} parent=1 // pred_check
      _
    $region7: #{tpu_custom_call.1} parent=1 // pred_check_branch
      %11 = sbr.rel (0) target = $region9
    $region8: #{tpu_custom_call.1} parent=1 // pred_region
      _
    $region9: #{tpu_custom_call.1} parent=1 // pred_fallthru
      _
    %v12 = vld [vmem:[%s1] sm:$0xff]
    %14 = vrot.lane.b32.xlu0 %v12, 32
    %v15 = vpop.permute.xlu0 %14
    %vm17 = vcmask 261120
    %v18 = vsel %vm17, %v12, %v15
    %v19 = vld [vmem:[%s0] sm:$0xff]
    %v20 = vadd.f32 %v19, %v18
    %vm21 = vcmask 523264
    %22 = vst.msk [vmem:[#allocation2] sm:$0xff] %vm21, %v20
    // Predicated region
    $region10: #{tpu_custom_call.1} parent=1 // pred_check
      _
    $region11: #{tpu_custom_call.1} parent=1 // pred_check_branch
      %24 = sbr.rel (0) target = $region13
    $region12: #{tpu_custom_call.1} parent=1 // pred_region
      %26 = vsyncadd [#allocation3], 0
      %s28 = sshll.u32 [#allocation2], 4
      %s29 = int_to_ptr.vmem [resolvable:$true] %s28
      %s30 = sshll.u32 %s2, 4
      %s31 = int_to_ptr.hbm [resolvable:$true] %s30
      %33 = dma.vmem_to_hbm [thread:$0]  %s29, 128, %s31, [#allocation3]
    $region13: #{tpu_custom_call.1} parent=1 // pred_fallthru
      _
    // Predicated region
    $region14: #{tpu_custom_call.1} parent=1 // pred_check
      _
    $region15: #{tpu_custom_call.1} parent=1 // pred_check_branch
      %35 = sbr.rel (0) target = $region17
    $region16: #{tpu_custom_call.1} parent=1 // pred_region
      %37 = dma.done [#allocation3], 128
    $region17: #{tpu_custom_call.1} parent=1 // pred_fallthru
      _
    %38 = vsyncpa [#allocation3], 1

</llo_original>
